<compile_context>
chip_gen: v7x
topology: tpu7x:2x2x1
jax: 0.10.0
libtpu: 0.0.40
codegen_flags: <defaults>
</compile_context>

<pallas_src>
import jax
import jax.numpy as jnp
from jax.experimental import pallas as pl
from jax.experimental.pallas import tpu as pltpu

LANE = 128


def _round_up(x, m):
    return (x + m - 1) // m * m


def mlp_kernel(x_ref, w_ref, b_ref, o_ref, acc_ref):
    """One (tm, tn) output block, reduced over the K grid axis."""
    k = pl.program_id(2)

    @pl.when(k == 0)
    def _():
        acc_ref[...] = jnp.zeros_like(acc_ref)

    acc_ref[...] += jnp.dot(
        x_ref[...], w_ref[...], preferred_element_type=jnp.float32
    )

    @pl.when(k == pl.num_programs(2) - 1)
    def _():
        y = acc_ref[...] + b_ref[...].astype(jnp.float32)   # bias broadcast (1, tn)
        o_ref[...] = jnp.tanh(y).astype(o_ref.dtype)


def make_mlp_layer(weight, bias, *, tile_m=256, tile_n=None, tile_k=None,
                   mxu_dtype=None):
    """Build the MLPLayer forward fn.

    weight: [H_out, H_in] (PyTorch nn.Linear layout), bias: [H_out].
    mxu_dtype: e.g. jnp.bfloat16 to feed the MXU bf16 operands (f32 accumulate).
    The transpose/pad of the static parameters happens here, once.
    """
    H_out, H_in = weight.shape
    assert bias.shape == (H_out,)

    op_dtype = jnp.dtype(mxu_dtype) if mxu_dtype is not None else jnp.dtype(weight.dtype)
    sub = 16 if op_dtype.itemsize == 2 else 8          # sublane packing for operands

    # ---- static parameter prep (ONCE, not per forward call) ----
    K_pad = _round_up(H_in, LANE)
    tn = tile_n if tile_n is not None else min(256, _round_up(H_out, LANE))
    tn = max(LANE, _round_up(tn, LANE))
    N_pad = _round_up(H_out, tn)

    if tile_k is not None:
        tk = max(LANE, _round_up(tile_k, LANE))
        K_pad = _round_up(K_pad, tk)
    else:
        tk = 512 if K_pad % 512 == 0 else (256 if K_pad % 256 == 0 else 128)
    tk = min(tk, K_pad)

    w_t = jnp.pad(weight.T, ((0, K_pad - H_in), (0, N_pad - H_out))).astype(op_dtype)
    b_row = jnp.pad(bias.astype(jnp.float32), (0, N_pad - H_out)).reshape(1, N_pad)

    def forward(features):
        B, h = features.shape
        assert h == H_in, f"expected hidden={H_in}, got {h}"
        out_dtype = features.dtype

        tm = min(_round_up(tile_m, sub), _round_up(B, sub))
        B_pad = _round_up(B, tm)

        x = features.astype(op_dtype) if mxu_dtype is not None else features
        x = jnp.pad(x, ((0, B_pad - B), (0, K_pad - H_in)))

        grid = (B_pad // tm, N_pad // tn, K_pad // tk)

        # VMEM budget (double-buffered in/out tiles + f32 accumulator) -> limit
        isz = op_dtype.itemsize
        osz = jnp.dtype(out_dtype).itemsize
        budget = (2 * tm * tk * isz          # x tiles
                  + 2 * tk * tn * isz        # weight tiles
                  + 2 * 8 * tn * 4           # bias row (sublane-padded)
                  + 2 * tm * tn * osz        # output tiles
                  + tm * tn * 4)             # accumulator scratch
        vmem_limit = min(max(2 * budget + (2 << 20), 16 << 20), 64 << 20)

        out_pad = pl.pallas_call(
            mlp_kernel,
            out_shape=jax.ShapeDtypeStruct((B_pad, N_pad), out_dtype),
            grid_spec=pltpu.PrefetchScalarGridSpec(
                num_scalar_prefetch=0,
                grid=grid,
                in_specs=[
                    pl.BlockSpec((tm, tk), lambda i, j, k: (i, k)),   # x tile
                    pl.BlockSpec((tk, tn), lambda i, j, k: (k, j)),   # weight tile
                    pl.BlockSpec((1, tn), lambda i, j, k: (0, j)),    # bias row
                ],
                out_specs=pl.BlockSpec((tm, tn), lambda i, j, k: (i, j)),
                scratch_shapes=[pltpu.VMEM((tm, tn), jnp.float32)],
            ),
            compiler_params=pltpu.CompilerParams(
                dimension_semantics=("parallel", "parallel", "arbitrary"),
                vmem_limit_bytes=vmem_limit,
            ),
        )(x, w_t, b_row)

        return out_pad[:B, :H_out]

    return forward


if __name__ == "__main__":
    key = jax.random.PRNGKey(0)
    k_x, k_w, k_b = jax.random.split(key, 3)

    batch, hidden = 8, 32   # config.hidden_size = 32 (small synthetic)

    features = jax.random.normal(k_x, (batch, hidden), dtype=jnp.float32)
    # Deterministic "nn.Linear" parameters (PyTorch weight layout [out, in]).
    weight = jax.random.normal(k_w, (hidden, hidden), dtype=jnp.float32) * 0.05
    bias = jax.random.normal(k_b, (hidden,), dtype=jnp.float32) * 0.05

    ref = jnp.tanh(features @ weight.T + bias)

    # f32 path (exact check).
    fwd = jax.jit(make_mlp_layer(weight, bias))
    out = jax.block_until_ready(fwd(features))
    assert out.shape == (batch, hidden)
    assert jnp.allclose(out, ref, atol=1e-5, rtol=1e-5), "f32 mismatch vs reference"

    # bf16-operand / f32-accumulate path (MXU-native on v6e/v7x).
    fwd_bf16 = jax.jit(make_mlp_layer(weight, bias, mxu_dtype=jnp.bfloat16))
    out_bf16 = jax.block_until_ready(fwd_bf16(features))
    assert out_bf16.shape == (batch, hidden)
    assert jnp.allclose(out_bf16, ref, atol=3e-2, rtol=3e-2), "bf16 mismatch vs reference"

    print("KERNEL_OK")
</pallas_src>

<mosaic_0001>
module attributes {stable_mosaic.version = 11 : i64} {
  func.func @mlp_kernel(%arg0: i32, %arg1: i32, %arg2: i32, %arg3: memref<8x128xf32, #tpu.memory_space<vmem>>, %arg4: memref<128x128xf32, #tpu.memory_space<vmem>>, %arg5: memref<1x128xf32, #tpu.memory_space<vmem>>, %arg6: memref<8x128xf32, #tpu.memory_space<vmem>>, %arg7: memref<8x128xf32, #tpu.memory_space<vmem>>) attributes {dimension_semantics = [#tpu.dimension_semantics<parallel>, #tpu.dimension_semantics<parallel>, #tpu.dimension_semantics<arbitrary>], iteration_bounds = array<i64: 1, 1, 1>, scalar_prefetch = 0 : i64, scratch_operands = 1 : i64, tpu.core_type = #tpu.core_type<tc>, window_params = [{transform_indices = @transform_0, window_bounds = array<i64: 8, 128>}, {transform_indices = @transform_1, window_bounds = array<i64: 128, 128>}, {transform_indices = @transform_2, window_bounds = array<i64: 1, 128>}, {transform_indices = @transform_3, window_bounds = array<i64: 8, 128>}]} {
    %c0_i32 = arith.constant 0 : i32
    %0 = arith.cmpi eq, %arg2, %c0_i32 : i32
    %1 = arith.extui %0 : i1 to i32
    %c0_i32_0 = arith.constant 0 : i32
    %2 = arith.cmpi ne, %1, %c0_i32_0 : i32
    scf.if %2 {
      %cst_10 = arith.constant 0.000000e+00 : f32
      %12 = vector.broadcast %cst_10 : f32 to vector<8x128xf32>
      %c0_11 = arith.constant 0 : index
      %c0_12 = arith.constant 0 : index
      %13 = vector.load %arg7[%c0_11, %c0_12] : memref<8x128xf32, #tpu.memory_space<vmem>>, vector<8x128xf32>
      tpu.vector_store %arg7[%c0_11, %c0_12], %12 {strides = array<i32>} : memref<8x128xf32, #tpu.memory_space<vmem>>, vector<8x128xf32>,
    } else {
    }
    %c0 = arith.constant 0 : index
    %c0_1 = arith.constant 0 : index
    %3 = vector.load %arg7[%c0, %c0_1] : memref<8x128xf32, #tpu.memory_space<vmem>>, vector<8x128xf32>
    %c0_2 = arith.constant 0 : index
    %c0_3 = arith.constant 0 : index
    %4 = vector.load %arg3[%c0_2, %c0_3] : memref<8x128xf32, #tpu.memory_space<vmem>>, vector<8x128xf32>
    %c0_4 = arith.constant 0 : index
    %c0_5 = arith.constant 0 : index
    %5 = vector.load %arg4[%c0_4, %c0_5] : memref<128x128xf32, #tpu.memory_space<vmem>>, vector<128x128xf32>
    %cst = arith.constant dense<0.000000e+00> : vector<8x128xf32>
    %6 = tpu.matmul %4, %5, %cst {dimension_numbers = #tpu.dot_dimension_numbers<[1], [0], [0], [1], [0, 0, 1, 1], [], []>} : vector<8x128xf32>, vector<128x128xf32>, vector<8x128xf32> -> vector<8x128xf32>
    %7 = arith.addf %3, %6 : vector<8x128xf32>
    %c0_6 = arith.constant 0 : index
    %c0_7 = arith.constant 0 : index
    %8 = vector.load %arg7[%c0_6, %c0_7] : memref<8x128xf32, #tpu.memory_space<vmem>>, vector<8x128xf32>
    tpu.vector_store %arg7[%c0_6, %c0_7], %7 {strides = array<i32>} : memref<8x128xf32, #tpu.memory_space<vmem>>, vector<8x128xf32>,
    %c0_i32_8 = arith.constant 0 : i32
    %9 = arith.cmpi eq, %arg2, %c0_i32_8 : i32
    %10 = arith.extui %9 : i1 to i32
    %c0_i32_9 = arith.constant 0 : i32
    %11 = arith.cmpi ne, %10, %c0_i32_9 : i32
    scf.if %11 {
      %c0_10 = arith.constant 0 : index
      %c0_11 = arith.constant 0 : index
      %12 = vector.load %arg7[%c0_10, %c0_11] : memref<8x128xf32, #tpu.memory_space<vmem>>, vector<8x128xf32>
      %c0_12 = arith.constant 0 : index
      %c0_13 = arith.constant 0 : index
      %13 = vector.load %arg5[%c0_12, %c0_13] : memref<1x128xf32, #tpu.memory_space<vmem>>, vector<1x128xf32>
      %14 = vector.broadcast %13 : vector<1x128xf32> to vector<8x128xf32>
      %15 = arith.addf %12, %14 : vector<8x128xf32>
      %16 = math.tanh %15 : vector<8x128xf32>
      %c0_14 = arith.constant 0 : index
      %c0_15 = arith.constant 0 : index
      %17 = vector.load %arg6[%c0_14, %c0_15] : memref<8x128xf32, #tpu.memory_space<vmem>>, vector<8x128xf32>
      tpu.vector_store %arg6[%c0_14, %c0_15], %16 {strides = array<i32>} : memref<8x128xf32, #tpu.memory_space<vmem>>, vector<8x128xf32>,
    } else {
    }
    return
  }
  func.func @transform_0(%arg0: i32, %arg1: i32, %arg2: i32) -> (i32, i32) {
    %c0_i32 = arith.constant 0 : i32
    return %arg0, %arg2 : i32, i32
  }
  func.func @transform_1(%arg0: i32, %arg1: i32, %arg2: i32) -> (i32, i32) {
    %c0_i32 = arith.constant 0 : i32
    return %arg2, %arg1 : i32, i32
  }
  func.func @transform_2(%arg0: i32, %arg1: i32, %arg2: i32) -> (i32, i32) {
    %c0_i32 = arith.constant 0 : i32
    %c0_i32_0 = arith.constant 0 : i32
    return %c0_i32, %arg1 : i32, i32
  }
  func.func @transform_3(%arg0: i32, %arg1: i32, %arg2: i32) -> (i32, i32) {
    %c0_i32 = arith.constant 0 : i32
    return %arg0, %arg1 : i32, i32
  }
}

</mosaic_0001>

<llo_original>
// kernel: forward.1
$region0: #{forward.1}
  #allocation0 [shape = 'u32[]', space=smem, size = 0x4, offset = 0x4, fixed_abs, tag = 'smem constant byte address 0x4 - core index']
  #allocation1 [shape = 'u32[144,128]{1,0:T(1,128)}', space=vmem, size = 0x12000, scoped, tag = 'internal scratch']
  #allocation2 [shape = 'f32[8,128]{1,0:T(8,128)}', space=vmem, size = 0x1000, scoped, tag = 'scratch operand']
  %s0 = inlined_call_operand.vmem [shape: f32[8,128], index: 0, kind: input, shape index: {}]
  %s1 = inlined_call_operand.hbm [shape: f32[128,128], index: 1, kind: input, shape index: {}]
  %s2 = inlined_call_operand.vmem [shape: f32[1,128], index: 2, kind: input, shape index: {}]
  %s3 = inlined_call_operand.hbm [shape: f32[8,128], index: 3, kind: output, shape index: {}]
  %s4 = sld [smem:[#allocation0]]
  $region34: #{forward.1} parent=0
    _
  %s6 = ssub.s32 1, %s4
  %s7 = scalar_select 0, %s6, %s4
  $region1: #{forward.1} parent=0
    #allocation3 [shape = 'u8[65536]{0}', space=vmem, size = 0x10000, scoped, tag = 'input window, operand 1, single buffered']
    #allocation4 [shape = 's32[1]{0}', space=sflag, size = 0x4, scoped, tag = 'scoped memory for forward.1']
    #allocation5 [shape = 's32[1]{0}', space=sflag, size = 0x4, scoped, tag = 'scoped memory for forward.1']
    #allocation6 [shape = 'u8[4096]{0}', space=vmem, size = 0x1000, scoped, tag = 'output window, operand 0, single buffered']
    %8 = vsyncpa [#allocation4], 0
    %9 = vsyncpa [#allocation5], 0
    // Predicated region
    $region2: #{forward.1} parent=1 // pred_check
      _
    $region3: #{forward.1} parent=1 // pred_check_branch
      %11 = sbr.rel (0) target = $region5
    $region4: #{forward.1} parent=1 // pred_region
      _
    $region5: #{forward.1} parent=1 // pred_fallthru
      _
    // Predicated region
    $region6: #{forward.1} parent=1 // pred_check
      _
    $region7: #{forward.1} parent=1 // pred_check_branch
      %13 = sbr.rel (0) target = $region9
    $region8: #{forward.1} parent=1 // pred_region
      %s15 = ssub.s32 2048, 2048
      %16 = vsyncadd [#allocation4], %s15
      %s17 = sshll.u32 [#allocation3], 4
      %s18 = int_to_ptr.vmem [resolvable:$true] %s17
      %23 = dma.hbm_to_vmem [thread:$0]  %s1, 2048, %s18, [#allocation4], 128, 128, 8
    $region9: #{forward.1} parent=1 // pred_fallthru
      _
    // Predicated region
    $region10: #{forward.1} parent=1 // pred_check
      _
    $region11: #{forward.1} parent=1 // pred_check_branch
      %25 = sbr.rel (0) target = $region13
    $region12: #{forward.1} parent=1 // pred_region
      _
    $region13: #{forward.1} parent=1 // pred_fallthru
      _
    // Predicated region
    $region14: #{forward.1} parent=1 // pred_check
      _
    $region15: #{forward.1} parent=1 // pred_check_branch
      %27 = sbr.rel (0) target = $region17
    $region16: #{forward.1} parent=1 // pred_region
      %28 = dma.done [#allocation4], 2048
    $region17: #{forward.1} parent=1 // pred_fallthru
      _
    %p29 = scmp.eq.s32.totalorder 0, 0
    // Predicated region
    $region18: #{forward.1} parent=1 // pred_check
      %p30 = pneg %p29
    $region19: #{forward.1} parent=1 // pred_check_branch
      %32 = sbr.rel (%p30) target = $region21
    $region20: #{forward.1} parent=1 // pred_region
      %33 = vst [vmem:[#allocation2] sm:$0xff] 0.0
    $region21: #{forward.1} parent=1 // pred_fallthru
      _
    %v34 = vld [vmem:[#allocation2] sm:$0xff]
    %v35 = vld [vmem:[%s0] sm:$0xff]
    %v36 = vld [vmem:[#allocation3] sm:$0xff]
    %v37 = vld [vmem:[#allocation3 + $0x8] sm:$0xff]
    %v38 = vld [vmem:[#allocation3 + $0x10] sm:$0xff]
    %v39 = vld [vmem:[#allocation3 + $0x18] sm:$0xff]
    %v40 = vld [vmem:[#allocation3 + $0x20] sm:$0xff]
    %v41 = vld [vmem:[#allocation3 + $0x28] sm:$0xff]
    %v42 = vld [vmem:[#allocation3 + $0x30] sm:$0xff]
    %v43 = vld [vmem:[#allocation3 + $0x38] sm:$0xff]
    %v44 = vld [vmem:[#allocation3 + $0x40] sm:$0xff]
    %v45 = vld [vmem:[#allocation3 + $0x48] sm:$0xff]
    %v46 = vld [vmem:[#allocation3 + $0x50] sm:$0xff]
    %v47 = vld [vmem:[#allocation3 + $0x58] sm:$0xff]
    %v48 = vld [vmem:[#allocation3 + $0x60] sm:$0xff]
    %v49 = vld [vmem:[#allocation3 + $0x68] sm:$0xff]
    %v50 = vld [vmem:[#allocation3 + $0x70] sm:$0xff]
    %v51 = vld [vmem:[#allocation3 + $0x78] sm:$0xff]
    %52 = vmatprep.subr.mxu0 0.0
    %53 = vmatpush1.msra.mxu0 %v36
    %54 = vmatprep.subr.mxu0 0.0
    %55 = vmatpush1.msra.mxu0 %v37
    %56 = vmatprep.subr.mxu0 0.0
    %57 = vmatpush1.msra.mxu0 %v38
    %58 = vmatprep.subr.mxu0 0.0
    %59 = vmatpush1.msra.mxu0 %v39
    %60 = vmatprep.subr.mxu0 0.0
    %61 = vmatpush1.msra.mxu0 %v40
    %62 = vmatprep.subr.mxu0 0.0
    %63 = vmatpush1.msra.mxu0 %v41
    %64 = vmatprep.subr.mxu0 0.0
    %65 = vmatpush1.msra.mxu0 %v42
    %66 = vmatprep.subr.mxu0 0.0
    %67 = vmatpush1.msra.mxu0 %v43
    %68 = vmatprep.subr.mxu0 0.0
    %69 = vmatpush1.msra.mxu0 %v44
    %70 = vmatprep.subr.mxu0 0.0
    %71 = vmatpush1.msra.mxu0 %v45
    %72 = vmatprep.subr.mxu0 0.0
    %73 = vmatpush1.msra.mxu0 %v46
    %74 = vmatprep.subr.mxu0 0.0
    %75 = vmatpush1.msra.mxu0 %v47
    %76 = vmatprep.subr.mxu0 0.0
    %77 = vmatpush1.msra.mxu0 %v48
    %78 = vmatprep.subr.mxu0 0.0
    %79 = vmatpush1.msra.mxu0 %v49
    %80 = vmatprep.subr.mxu0 0.0
    %81 = vmatpush1.msra.mxu0 %v50
    %82 = vmatprep.subr.mxu0 0.0
    %83 = vmatpush1.msra.mxu0 %v51
    %84 = vmatprep.subr.mxu0 0.0
    %85 = vmatpush1.msra.mxu0 0.0
    %86 = vmatprep.subr.mxu0 0.0
    %87 = vmatpush1.msra.mxu0 0.0
    %88 = vmatprep.subr.mxu0 0.0
    %89 = vmatpush1.msra.mxu0 0.0
    %90 = vmatprep.subr.mxu0 0.0
    %91 = vmatpush1.msra.mxu0 0.0
    %92 = vmatprep.subr.mxu0 0.0
    %93 = vmatpush1.msra.mxu0 0.0
    %94 = vmatprep.subr.mxu0 0.0
    %95 = vmatpush1.msra.mxu0 0.0
    %96 = vmatprep.subr.mxu0 0.0
    %97 = vmatpush1.msra.mxu0 0.0
    %98 = vmatprep.subr.mxu0 0.0
    %99 = vmatpush1.msra.mxu0 0.0
    %100 = vmatprep.subr.mxu0 0.0
    %101 = vmatpush1.msra.mxu0 0.0
    %102 = vmatprep.subr.mxu0 0.0
    %103 = vmatpush1.msra.mxu0 0.0
    %104 = vmatprep.subr.mxu0 0.0
    %105 = vmatpush1.msra.mxu0 0.0
    %106 = vmatprep.subr.mxu0 0.0
    %107 = vmatpush1.msra.mxu0 0.0
    %108 = vmatprep.subr.mxu0 0.0
    %109 = vmatpush1.msra.mxu0 0.0
    %110 = vmatprep.subr.mxu0 0.0
    %111 = vmatpush1.msra.mxu0 0.0
    %112 = vmatprep.subr.mxu0 0.0
    %113 = vmatpush1.msra.mxu0 0.0
    %114 = vmatprep.subr.mxu0 0.0
    %115 = vmatpush1.msra.mxu0 0.0
    %116 = vmatprep.mubr.f32.mxu0 0.0
    %117 = vmatmul.mubr.f32.gmra.mrb[0].mxu0 %v35
    %v118 = vpop.f32.mrb[0].mxu0
    %v119 = vadd.f32 0.0, %v118
    %v120 = vpop.f32.mrb[0].mxu0
    %121 = vdwg.mxu0
    %v122 = vadd.f32 %v34, %v119
    %123 = vst [vmem:[#allocation2] sm:$0xff] %v122
    // Predicated region
    $region22: #{forward.1} parent=1 // pred_check
      %p124 = pneg %p29
    $region23: #{forward.1} parent=1 // pred_check_branch
      %126 = sbr.rel (%p124) target = $region25
    $region24: #{forward.1} parent=1 // pred_region
      %v127 = vld [vmem:[#allocation2] sm:$0xff]
      %v128 = vld [vmem:[%s2] sm:$0x1]
      %v130 = vlaneseq
      %v131 = vshrl.u32 %v130, 7
      %v132 = vsub.s32 0, %v131
      %v133 = vrot.slane %v128, %v132
      %v135 = vadd.f32 %v127, %v133
      %v136 = vtanh.pop %v135
      %137 = vst [vmem:[#allocation6] sm:$0xff] %v136
    $region25: #{forward.1} parent=1 // pred_fallthru
      _
    // Predicated region
    $region26: #{forward.1} parent=1 // pred_check
      _
    $region27: #{forward.1} parent=1 // pred_check_branch
      %139 = sbr.rel (0) target = $region29
    $region28: #{forward.1} parent=1 // pred_region
      %s141 = ssub.s32 128, 128
      %142 = vsyncadd [#allocation5], %s141
      %s144 = sshll.u32 [#allocation6], 4
      %s145 = int_to_ptr.vmem [resolvable:$true] %s144
      %147 = dma.vmem_to_hbm [thread:$0]  %s145, 128, %s3, [#allocation5]
    $region29: #{forward.1} parent=1 // pred_fallthru
      _
    // Predicated region
    $region30: #{forward.1} parent=1 // pred_check
      _
    $region31: #{forward.1} parent=1 // pred_check_branch
      %149 = sbr.rel (0) target = $region33
    $region32: #{forward.1} parent=1 // pred_region
      %150 = dma.done [#allocation5], 128
    $region33: #{forward.1} parent=1 // pred_fallthru
      _
    %151 = vsyncpa [#allocation4], 1
    %152 = vsyncpa [#allocation5], 1

</llo_original>
